<compile_context>
chip_gen: v7x
topology: tpu7x:2x2x1
jax: 0.10.0
libtpu: 0.0.40
codegen_flags: <defaults>
</compile_context>

<pallas_src>
import functools

import jax
import jax.numpy as jnp
from jax import lax
from jax.experimental import pallas as pl
from jax.experimental.pallas import tpu as pltpu


def _dvae_encoder_kernel(x_ref, w1_ref, b1_ref, w2_ref, b2_ref,
                         tgt_ref, hid_ref, *, nevents_per_token):
    # x_ref  : (tile_T, F) bf16   one tile of tokens from a single batch row,
    #                             F = d_event * nevents_per_token (channel-major)
    # w1_ref : (F, E) f32, b1_ref: (1, E) f32
    # w2_ref : (E, V) f32, b2_ref: (1, V) f32
    # tgt_ref: (tile_T, 1) int32  argmax token id per row
    # hid_ref: (1, V) f32         per-batch one-hot histogram, accumulated over token tiles
    K = nevents_per_token
    R, F = x_ref.shape
    V = w2_ref.shape[1]

    x = x_ref[...].astype(jnp.float32)                      # (R, F)

    # --- channel-0 (time) normalization on the first K lanes ----------------
    t_start = x[:, 0:1]                                     # (R, 1)
    t_end = x[:, K - 1:K]                                   # (R, 1)
    # NOTE: exact reciprocal; approx=True would use the (idle) EUP slot but the
    # kernel is memory-bound and exactness keeps parity with the reference.
    # Degenerate tokens (t_end == t_start) produce inf/nan, same as the module.
    inv = pl.reciprocal(t_end - t_start, approx=False)      # (R, 1)
    lane = lax.broadcasted_iota(jnp.int32, (R, F), 1)
    x = jnp.where(lane < K, (x - t_start) * inv, x)

    # --- dVAE head: flatten -> Linear(E) -> ReLU -> Linear(V) ---------------
    h = jnp.dot(x, w1_ref[...], preferred_element_type=jnp.float32) + b1_ref[...]
    h = jnp.maximum(h, 0.0)
    logits = jnp.dot(h, w2_ref[...], preferred_element_type=jnp.float32) + b2_ref[...]

    # --- argmax over vocab (first maximal index, matches torch.argmax) ------
    mx = jnp.max(logits, axis=-1, keepdims=True)             # (R, 1)
    vlane = lax.broadcasted_iota(jnp.int32, (R, V), 1)        # (R, V)
    idx = jnp.min(jnp.where(logits == mx, vlane, V), axis=-1, keepdims=True)
    tgt_ref[...] = idx.astype(jnp.int32)

    # --- hidden = one_hot(target) summed over this batch row's tokens -------
    onehot = (vlane == idx).astype(jnp.float32)               # (R, V)

    @pl.when(pl.program_id(1) == 0)
    def _():
        hid_ref[...] = jnp.zeros_like(hid_ref)

    hid_ref[...] += jnp.sum(onehot, axis=0, keepdims=True)


def _auto_tile_tokens(T, cap=512):
    """Largest multiple-of-8 divisor of T that is <= cap (fall back to T)."""
    if T <= cap:
        return T
    for cand in range(cap, 7, -1):
        if T % cand == 0 and cand % 8 == 0:
            return cand
    return T


def discrete_event_vae_encoder(x, params, *, nevents_per_token, vocab_size,
                               return_hidden=True, tile_tokens=None,
                               input_dtype=jnp.bfloat16):
    """x: (batch, seq_len, d_event) float32."""
    w1, b1, w2, b2 = params
    B, S, D = x.shape
    assert S % nevents_per_token == 0
    K = nevents_per_token
    T = S // K
    F = D * K
    E = w1.shape[-1]
    V = vocab_size
    assert w1.shape == (F, E) and b1.shape == (1, E)
    assert w2.shape == (E, V) and b2.shape == (1, V)

    # glue reshapes (mirror torch .view / .permute / flatten, channel-major)
    xr = x.reshape(B, T, K, D).transpose(0, 1, 3, 2).reshape(B, T, F)
    xr = xr.astype(input_dtype)          # bf16 halves HBM traffic of the hot input

    if tile_tokens is None:
        tile_tokens = _auto_tile_tokens(T)
    assert T % tile_tokens == 0
    assert tile_tokens == T or tile_tokens % 8 == 0
    n_t = T // tile_tokens
    grid = (B, n_t)

    kernel = functools.partial(_dvae_encoder_kernel, nevents_per_token=K)

    tgt, hid = pl.pallas_call(
        kernel,
        out_shape=(
            jax.ShapeDtypeStruct((B, T, 1), jnp.int32),
            jax.ShapeDtypeStruct((B, 1, V), jnp.float32),
        ),
        grid_spec=pltpu.PrefetchScalarGridSpec(
            num_scalar_prefetch=0,
            grid=grid,
            in_specs=[
                pl.BlockSpec((None, tile_tokens, F), lambda b, t: (b, t, 0)),  # x
                pl.BlockSpec((F, E), lambda b, t: (0, 0)),                     # w1
                pl.BlockSpec((1, E), lambda b, t: (0, 0)),                     # b1
                pl.BlockSpec((E, V), lambda b, t: (0, 0)),                     # w2
                pl.BlockSpec((1, V), lambda b, t: (0, 0)),                     # b2
            ],
            out_specs=(
                pl.BlockSpec((None, tile_tokens, 1), lambda b, t: (b, t, 0)),  # target
                pl.BlockSpec((None, 1, V), lambda b, t: (b, 0, 0)),            # hidden acc
            ),
        ),
        compiler_params=pltpu.CompilerParams(
            dimension_semantics=("parallel", "arbitrary"),
            vmem_limit_bytes=32 * 1024 * 1024,
        ),
    )(xr, w1, b1, w2, b2)

    target = tgt.reshape(B, T)
    if return_hidden:
        return target, hid.reshape(B, V)
    return target


def _reference(x, params, *, nevents_per_token, vocab_size,
               input_dtype=jnp.bfloat16):
    """Pure-JAX reference mirroring the PyTorch forward (return_hidden=True),
    with the same input-dtype strategy as the kernel."""
    w1, b1, w2, b2 = params
    B, S, D = x.shape
    K = nevents_per_token
    T = S // K
    F = D * K
    xr = x.reshape(B, T, K, D).transpose(0, 1, 3, 2).reshape(B * T, F)
    xr = xr.astype(input_dtype).astype(jnp.float32)
    t_start = xr[:, 0:1]
    t_end = xr[:, K - 1:K]
    inv = 1.0 / (t_end - t_start)
    col = jnp.arange(F)[None, :]
    xn = jnp.where(col < K, (xr - t_start) * inv, xr)
    h = jnp.maximum(
        jnp.dot(xn, w1, precision=lax.Precision.HIGHEST) + b1, 0.0)
    logits = jnp.dot(h, w2, precision=lax.Precision.HIGHEST) + b2
    target = jnp.argmax(logits, axis=-1).reshape(B, T)
    hidden = jax.nn.one_hot(target, vocab_size, dtype=jnp.float32).sum(axis=1)
    return target, hidden


if __name__ == "__main__":
    # small, module-consistent shapes
    batch = 2
    nevents_per_token = 16
    dim_embedding = 32
    vocab_size = 128
    d_event = 4
    seq_len = 256                        # 16 tokens per batch row

    key = jax.random.PRNGKey(0)
    kx, kt, k1, k2, k3, k4 = jax.random.split(key, 6)

    x = jax.random.normal(kx, (batch, seq_len, d_event), dtype=jnp.float32)
    # make the time channel (feature 0) strictly increasing so t_end != t_start
    times = jnp.cumsum(jax.random.uniform(kt, (batch, seq_len)) + 0.1, axis=1)
    x = x.at[:, :, 0].set(times)

    # deterministic synthetic parameters for the dVAE logits head
    F = d_event * nevents_per_token
    w1 = (jax.random.normal(k1, (F, dim_embedding), dtype=jnp.float32)
          * (1.0 / jnp.sqrt(F)))
    b1 = jax.random.normal(k2, (1, dim_embedding), dtype=jnp.float32) * 0.02
    w2 = (jax.random.normal(k3, (dim_embedding, vocab_size), dtype=jnp.float32)
          * (1.0 / jnp.sqrt(dim_embedding)))
    b2 = jax.random.normal(k4, (1, vocab_size), dtype=jnp.float32) * 0.02
    params = (w1, b1, w2, b2)

    # tile_tokens=8 -> grid (batch=2, token_tiles=2): exercises the pipelined
    # grid and the hidden accumulator across token tiles.
    target, hidden = discrete_event_vae_encoder(
        x, params, nevents_per_token=nevents_per_token,
        vocab_size=vocab_size, return_hidden=True, tile_tokens=8)
    jax.block_until_ready((target, hidden))

    ref_target, ref_hidden = _reference(
        x, params, nevents_per_token=nevents_per_token, vocab_size=vocab_size)

    assert target.shape == (batch, seq_len // nevents_per_token)
    assert hidden.shape == (batch, vocab_size)
    assert jnp.array_equal(target, ref_target)
    assert jnp.allclose(hidden, ref_hidden)

    print("KERNEL_OK")
</pallas_src>

<mosaic_0001>
module attributes {stable_mosaic.version = 11 : i64} {
  func.func @_dvae_encoder_kernel(%arg0: i32, %arg1: i32, %arg2: memref<1x8x64xbf16, #tpu.memory_space<vmem>>, %arg3: memref<64x32xf32, #tpu.memory_space<vmem>>, %arg4: memref<1x32xf32, #tpu.memory_space<vmem>>, %arg5: memref<32x128xf32, #tpu.memory_space<vmem>>, %arg6: memref<1x128xf32, #tpu.memory_space<vmem>>, %arg7: memref<1x8x1xi32, #tpu.memory_space<vmem>>, %arg8: memref<1x1x128xf32, #tpu.memory_space<vmem>>) attributes {dimension_semantics = [#tpu.dimension_semantics<parallel>, #tpu.dimension_semantics<arbitrary>], iteration_bounds = array<i64: 2, 2>, scalar_prefetch = 0 : i64, scratch_operands = 0 : i64, tpu.core_type = #tpu.core_type<tc>, window_params = [{transform_indices = @transform_0, window_bounds = array<i64: 1, 8, 64>}, {pipeline_mode = #tpu.pipeline_mode<synchronous>, transform_indices = @transform_1, window_bounds = array<i64: 64, 32>}, {pipeline_mode = #tpu.pipeline_mode<synchronous>, transform_indices = @transform_2, window_bounds = array<i64: 1, 32>}, {pipeline_mode = #tpu.pipeline_mode<synchronous>, transform_indices = @transform_3, window_bounds = array<i64: 32, 128>}, {pipeline_mode = #tpu.pipeline_mode<synchronous>, transform_indices = @transform_4, window_bounds = array<i64: 1, 128>}, {transform_indices = @transform_5, window_bounds = array<i64: 1, 8, 1>}, {transform_indices = @transform_6, window_bounds = array<i64: 1, 1, 128>}]} {
    %c0 = arith.constant 0 : index
    %c0_0 = arith.constant 0 : index
    %c0_1 = arith.constant 0 : index
    %0 = vector.load %arg2[%c0, %c0_0, %c0_1] : memref<1x8x64xbf16, #tpu.memory_space<vmem>>, vector<1x8x64xbf16>
    %1 = vector.shape_cast %0 : vector<1x8x64xbf16> to vector<8x64xbf16>
    %2 = arith.extf %1 : vector<8x64xbf16> to vector<8x64xf32>
    %3 = vector.extract_strided_slice %2 {offsets = [0, 0], sizes = [8, 1], strides = [1, 1]} : vector<8x64xf32> to vector<8x1xf32>
    %4 = vector.extract_strided_slice %2 {offsets = [0, 15], sizes = [8, 1], strides = [1, 1]} : vector<8x64xf32> to vector<8x1xf32>
    %5 = arith.subf %4, %3 : vector<8x1xf32>
    %6 = tpu.reciprocal %5 : vector<8x1xf32> -> vector<8x1xf32>
    %7 = tpu.iota {dimensions = array<i32: 1>} : vector<8x64xi32>
    %c16_i32 = arith.constant 16 : i32
    %8 = vector.broadcast %c16_i32 : i32 to vector<8x64xi32>
    %9 = arith.cmpi slt, %7, %8 : vector<8x64xi32>
    %10 = vector.broadcast %3 : vector<8x1xf32> to vector<8x64xf32>
    %11 = arith.subf %2, %10 : vector<8x64xf32>
    %12 = vector.broadcast %6 : vector<8x1xf32> to vector<8x64xf32>
    %13 = arith.mulf %11, %12 : vector<8x64xf32>
    %14 = arith.select %9, %13, %2 : vector<8x64xi1>, vector<8x64xf32>
    %c0_2 = arith.constant 0 : index
    %c0_3 = arith.constant 0 : index
    %15 = vector.load %arg3[%c0_2, %c0_3] : memref<64x32xf32, #tpu.memory_space<vmem>>, vector<64x32xf32>
    %cst = arith.constant dense<0.000000e+00> : vector<8x32xf32>
    %16 = tpu.matmul %14, %15, %cst {dimension_numbers = #tpu.dot_dimension_numbers<[1], [0], [0], [1], [0, 0, 1, 1], [], []>} : vector<8x64xf32>, vector<64x32xf32>, vector<8x32xf32> -> vector<8x32xf32>
    %c0_4 = arith.constant 0 : index
    %c0_5 = arith.constant 0 : index
    %17 = vector.load %arg4[%c0_4, %c0_5] : memref<1x32xf32, #tpu.memory_space<vmem>>, vector<1x32xf32>
    %18 = vector.broadcast %17 : vector<1x32xf32> to vector<8x32xf32>
    %19 = arith.addf %16, %18 : vector<8x32xf32>
    %cst_6 = arith.constant 0.000000e+00 : f32
    %20 = vector.broadcast %cst_6 : f32 to vector<8x32xf32>
    %21 = arith.maximumf %19, %20 : vector<8x32xf32>
    %c0_7 = arith.constant 0 : index
    %c0_8 = arith.constant 0 : index
    %22 = vector.load %arg5[%c0_7, %c0_8] : memref<32x128xf32, #tpu.memory_space<vmem>>, vector<32x128xf32>
    %cst_9 = arith.constant dense<0.000000e+00> : vector<8x128xf32>
    %23 = tpu.matmul %21, %22, %cst_9 {dimension_numbers = #tpu.dot_dimension_numbers<[1], [0], [0], [1], [0, 0, 1, 1], [], []>} : vector<8x32xf32>, vector<32x128xf32>, vector<8x128xf32> -> vector<8x128xf32>
    %c0_10 = arith.constant 0 : index
    %c0_11 = arith.constant 0 : index
    %24 = vector.load %arg6[%c0_10, %c0_11] : memref<1x128xf32, #tpu.memory_space<vmem>>, vector<1x128xf32>
    %25 = vector.broadcast %24 : vector<1x128xf32> to vector<8x128xf32>
    %26 = arith.addf %23, %25 : vector<8x128xf32>
    %cst_12 = arith.constant dense<0xFF800000> : vector<8xf32>
    %27 = vector.multi_reduction <maximumf>, %26, %cst_12 [1] : vector<8x128xf32> to vector<8xf32>
    %28 = vector.shape_cast %27 : vector<8xf32> to vector<8x1xf32>
    %29 = tpu.iota {dimensions = array<i32: 1>} : vector<8x128xi32>
    %30 = vector.broadcast %28 : vector<8x1xf32> to vector<8x128xf32>
    %31 = arith.cmpf oeq, %26, %30 : vector<8x128xf32>
    %c128_i32 = arith.constant 128 : i32
    %32 = vector.broadcast %c128_i32 : i32 to vector<8x128xi32>
    %33 = arith.select %31, %29, %32 : vector<8x128xi1>, vector<8x128xi32>
    %cst_13 = arith.constant dense<2147483647> : vector<8xi32>
    %34 = vector.multi_reduction <minsi>, %33, %cst_13 [1] : vector<8x128xi32> to vector<8xi32>
    %35 = vector.shape_cast %34 : vector<8xi32> to vector<8x1xi32>
    %c0_14 = arith.constant 0 : index
    %c0_15 = arith.constant 0 : index
    %c0_16 = arith.constant 0 : index
    %36 = vector.load %arg7[%c0_14, %c0_15, %c0_16] : memref<1x8x1xi32, #tpu.memory_space<vmem>>, vector<1x8x1xi32>
    %37 = vector.shape_cast %36 : vector<1x8x1xi32> to vector<8x1xi32>
    %38 = vector.shape_cast %35 : vector<8x1xi32> to vector<1x8x1xi32>
    tpu.vector_store %arg7[%c0_14, %c0_15, %c0_16], %38 {strides = array<i32>} : memref<1x8x1xi32, #tpu.memory_space<vmem>>, vector<1x8x1xi32>,
    %39 = vector.broadcast %35 : vector<8x1xi32> to vector<8x128xi32>
    %40 = arith.cmpi eq, %29, %39 : vector<8x128xi32>
    %41 = arith.extui %40 : vector<8x128xi1> to vector<8x128xi32>
    %42 = arith.sitofp %41 : vector<8x128xi32> to vector<8x128xf32>
    %c0_i32 = arith.constant 0 : i32
    %43 = arith.cmpi eq, %arg1, %c0_i32 : i32
    %44 = arith.extui %43 : i1 to i32
    %c0_i32_17 = arith.constant 0 : i32
    %45 = arith.cmpi ne, %44, %c0_i32_17 : i32
    scf.if %45 {
      %cst_25 = arith.constant 0.000000e+00 : f32
      %54 = vector.broadcast %cst_25 : f32 to vector<1x128xf32>
      %c0_26 = arith.constant 0 : index
      %c0_27 = arith.constant 0 : index
      %c0_28 = arith.constant 0 : index
      %55 = vector.load %arg8[%c0_26, %c0_27, %c0_28] : memref<1x1x128xf32, #tpu.memory_space<vmem>>, vector<1x1x128xf32>
      %56 = vector.shape_cast %55 : vector<1x1x128xf32> to vector<1x128xf32>
      %57 = vector.shape_cast %54 : vector<1x128xf32> to vector<1x1x128xf32>
      tpu.vector_store %arg8[%c0_26, %c0_27, %c0_28], %57 {strides = array<i32>} : memref<1x1x128xf32, #tpu.memory_space<vmem>>, vector<1x1x128xf32>,
    } else {
    }
    %c0_18 = arith.constant 0 : index
    %c0_19 = arith.constant 0 : index
    %c0_20 = arith.constant 0 : index
    %46 = vector.load %arg8[%c0_18, %c0_19, %c0_20] : memref<1x1x128xf32, #tpu.memory_space<vmem>>, vector<1x1x128xf32>
    %47 = vector.shape_cast %46 : vector<1x1x128xf32> to vector<1x128xf32>
    %cst_21 = arith.constant dense<0.000000e+00> : vector<128xf32>
    %48 = vector.multi_reduction <add>, %42, %cst_21 [0] : vector<8x128xf32> to vector<128xf32>
    %49 = vector.shape_cast %48 : vector<128xf32> to vector<1x128xf32>
    %50 = arith.addf %47, %49 : vector<1x128xf32>
    %c0_22 = arith.constant 0 : index
    %c0_23 = arith.constant 0 : index
    %c0_24 = arith.constant 0 : index
    %51 = vector.load %arg8[%c0_22, %c0_23, %c0_24] : memref<1x1x128xf32, #tpu.memory_space<vmem>>, vector<1x1x128xf32>
    %52 = vector.shape_cast %51 : vector<1x1x128xf32> to vector<1x128xf32>
    %53 = vector.shape_cast %50 : vector<1x128xf32> to vector<1x1x128xf32>
    tpu.vector_store %arg8[%c0_22, %c0_23, %c0_24], %53 {strides = array<i32>} : memref<1x1x128xf32, #tpu.memory_space<vmem>>, vector<1x1x128xf32>,
    return
  }
  func.func @transform_0(%arg0: i32, %arg1: i32) -> (i32, i32, i32) {
    %c0_i32 = arith.constant 0 : i32
    %c0_i32_0 = arith.constant 0 : i32
    return %arg0, %arg1, %c0_i32 : i32, i32, i32
  }
  func.func @transform_1(%arg0: i32, %arg1: i32) -> (i32, i32) {
    %c0_i32 = arith.constant 0 : i32
    %c0_i32_0 = arith.constant 0 : i32
    %c0_i32_1 = arith.constant 0 : i32
    return %c0_i32, %c0_i32_0 : i32, i32
  }
  func.func @transform_2(%arg0: i32, %arg1: i32) -> (i32, i32) {
    %c0_i32 = arith.constant 0 : i32
    %c0_i32_0 = arith.constant 0 : i32
    %c0_i32_1 = arith.constant 0 : i32
    return %c0_i32, %c0_i32_0 : i32, i32
  }
  func.func @transform_3(%arg0: i32, %arg1: i32) -> (i32, i32) {
    %c0_i32 = arith.constant 0 : i32
    %c0_i32_0 = arith.constant 0 : i32
    %c0_i32_1 = arith.constant 0 : i32
    return %c0_i32, %c0_i32_0 : i32, i32
  }
  func.func @transform_4(%arg0: i32, %arg1: i32) -> (i32, i32) {
    %c0_i32 = arith.constant 0 : i32
    %c0_i32_0 = arith.constant 0 : i32
    %c0_i32_1 = arith.constant 0 : i32
    return %c0_i32, %c0_i32_0 : i32, i32
  }
  func.func @transform_5(%arg0: i32, %arg1: i32) -> (i32, i32, i32) {
    %c0_i32 = arith.constant 0 : i32
    %c0_i32_0 = arith.constant 0 : i32
    return %arg0, %arg1, %c0_i32 : i32, i32, i32
  }
  func.func @transform_6(%arg0: i32, %arg1: i32) -> (i32, i32, i32) {
    %c0_i32 = arith.constant 0 : i32
    %c0_i32_0 = arith.constant 0 : i32
    %c0_i32_1 = arith.constant 0 : i32
    return %arg0, %c0_i32, %c0_i32_0 : i32, i32, i32
  }
}

</mosaic_0001>

<llo_original>
// kernel: tpu_custom_call.1
$region0: #{tpu_custom_call.1}
  #allocation0 [shape = 'u32[]', space=smem, size = 0x4, offset = 0x4, fixed_abs, tag = 'smem constant byte address 0x4 - core index']
  #allocation1 [shape = 'u32[144,128]{1,0:T(1,128)}', space=vmem, size = 0x12000, scoped, tag = 'internal scratch']
  %s0 = inlined_call_operand.vmem [shape: bf16[2,16,64], index: 0, kind: input, shape index: {}]
  %s1 = inlined_call_operand.vmem [shape: f32[64,32], index: 1, kind: input, shape index: {}]
  %s2 = inlined_call_operand.vmem [shape: f32[1,32], index: 2, kind: input, shape index: {}]
  %s3 = inlined_call_operand.vmem [shape: f32[32,128], index: 3, kind: input, shape index: {}]
  %s4 = inlined_call_operand.vmem [shape: f32[1,128], index: 4, kind: input, shape index: {}]
  %s5 = inlined_call_operand.vmem [shape: s32[2,16,1], index: 5, kind: output, shape index: {0}]
  %s6 = inlined_call_operand.hbm [shape: f32[2,1,128], index: 6, kind: output, shape index: {1}]
  %7 = xla_tuple %s5, %s6
  %s8 = sld [smem:[#allocation0]]
  $region65: #{tpu_custom_call.1} parent=0
    _
  %s10 = ssub.s32 1, %s8
  %s11 = scalar_select 0, %s10, %s8
  $region1: #{tpu_custom_call.1} parent=0
    #allocation2 [shape = 'u8[1024]{0}', space=vmem, size = 0x400, scoped, tag = 'output window, operand 1']
    #allocation3 [shape = 's32[2]{0}', space=sflag, size = 0x8, scoped, tag = 'scoped memory for tpu_custom_call.1']
    %12 = vsyncpa [#allocation3], 0
    %s13 = scalar_lea.sflag [#allocation3], 1
    %14 = vsyncpa %s13, 0
    loop: start=0, step=1, limit=6
    $region2: #{tpu_custom_call.1} parent=1 // loop_pre_header
      _
    $region3: #{tpu_custom_call.1} parent=1 // loop_header
      %s16 = sphi 0, %s20
      %p17 = scmp.ge.s32.totalorder %s16, 6
      %s23 = sphi 0, %s35
      %s24 = sphi 0, %s31
      %s25 = sphi 0, %s23
      %s26 = sphi 0, %s24
      %s27 = sphi 0, %s25
      %s28 = sphi 0, %s26
      %s40 = sphi 0, %s42
      %s43 = sphi 0, %s40
      %s44 = sphi 0, %s43
      %s60 = sphi 0, %s44
      %s64 = sphi 0, %s64
      %s66 = sphi 0, %s64
      %s67 = sphi 0, %s66
      %s81 = sphi 0, %s67
      %s85 = sphi 0, %s85
      %s87 = sphi 0, %s85
      %s88 = sphi 0, %s87
      %s102 = sphi 0, %s88
      %s106 = sphi 0, %s106
      %s108 = sphi 0, %s106
      %s109 = sphi 0, %s108
      %s123 = sphi 0, %s109
      %s127 = sphi 0, %s127
      %s129 = sphi 0, %s127
      %s130 = sphi 0, %s129
      %s144 = sphi 0, %s130
      %s152 = sphi 0, %s154
      %s155 = sphi 0, %s152
      %s156 = sphi 0, %s155
      %s172 = sphi 0, %s156
      %s178 = sphi 0, %s180
      %s181 = sphi 0, %s178
      %s182 = sphi 0, %s181
      %s198 = sphi 0, %s182
    $region4: #{tpu_custom_call.1} parent=1 // loop_header_branch
      %19 = sbr.rel (%p17) target = $region8
    $region5: #{tpu_custom_call.1} parent=1 // loop_body
      %s21 = ssub.s32 %s16, 1
      %s22 = ssub.s32 %s16, 2
      %s29 = sadd.s32 1, %s24
      %p30 = scmp.ge.s32.totalorder %s29, 2
      %s31 = scalar_select %p30, 0, %s29
      %s32 = sadd.s32 1, %s23
      %s33 = scalar_select %p30, %s32, %s23
      %p34 = scmp.ge.s32.totalorder %s33, 2
      %s35 = scalar_select %p34, 0, %s33
      %s36 = ssub.s32 %s23, %s35
      %s37 = ssub.s32 %s24, %s31
      %s38 = sor.u32 %s36, %s37
      %p39 = scmp.eq.s32.totalorder %s38, 0
      %s41 = sadd.s32 %s40, 1
      %s42 = scalar_select %p39, %s40, %s41
      %p45 = pneg %p39
      %p46 = scmp.eq.s32.totalorder %s16, 3
      %p47 = por %p45, %p46
      %p48 = scmp.ne.s32.totalorder %s40, %s43
      %p49 = scmp.eq.s32.totalorder %s16, 0
      %p50 = por %p48, %p49
      %p51 = scmp.ne.s32.totalorder %s40, %s43
      %p52 = scmp.eq.s32.totalorder %s21, 3
      %p53 = por %p51, %p52
      %p54 = scmp.ne.s32.totalorder %s43, %s44
      %p55 = scmp.eq.s32.totalorder %s21, 0
      %p56 = por %p54, %p55
      %p57 = scmp.ne.s32.totalorder %s43, %s44
      %p58 = scmp.eq.s32.totalorder %s22, 3
      %p59 = por %p57, %p58
      %p61 = scmp.ne.s32.totalorder %s44, %s60
      %p62 = scmp.eq.s32.totalorder %s22, 0
      %p63 = por %p61, %p62
      %s65 = sadd.s32 %s64, 1
      %p68 = scmp.eq.s32.totalorder %s16, 3
      %p69 = scmp.ne.s32.totalorder %s64, %s66
      %p70 = scmp.eq.s32.totalorder %s16, 0
      %p71 = por %p69, %p70
      %p72 = scmp.ne.s32.totalorder %s64, %s66
      %p73 = scmp.eq.s32.totalorder %s21, 3
      %p74 = por %p72, %p73
      %p75 = scmp.ne.s32.totalorder %s66, %s67
      %p76 = scmp.eq.s32.totalorder %s21, 0
      %p77 = por %p75, %p76
      %p78 = scmp.ne.s32.totalorder %s66, %s67
      %p79 = scmp.eq.s32.totalorder %s22, 3
      %p80 = por %p78, %p79
      %p82 = scmp.ne.s32.totalorder %s67, %s81
      %p83 = scmp.eq.s32.totalorder %s22, 0
      %p84 = por %p82, %p83
      %s86 = sadd.s32 %s85, 1
      %p89 = scmp.eq.s32.totalorder %s16, 3
      %p90 = scmp.ne.s32.totalorder %s85, %s87
      %p91 = scmp.eq.s32.totalorder %s16, 0
      %p92 = por %p90, %p91
      %p93 = scmp.ne.s32.totalorder %s85, %s87
      %p94 = scmp.eq.s32.totalorder %s21, 3
      %p95 = por %p93, %p94
      %p96 = scmp.ne.s32.totalorder %s87, %s88
      %p97 = scmp.eq.s32.totalorder %s21, 0
      %p98 = por %p96, %p97
      %p99 = scmp.ne.s32.totalorder %s87, %s88
      %p100 = scmp.eq.s32.totalorder %s22, 3
      %p101 = por %p99, %p100
      %p103 = scmp.ne.s32.totalorder %s88, %s102
      %p104 = scmp.eq.s32.totalorder %s22, 0
      %p105 = por %p103, %p104
      %s107 = sadd.s32 %s106, 1
      %p110 = scmp.eq.s32.totalorder %s16, 3
      %p111 = scmp.ne.s32.totalorder %s106, %s108
      %p112 = scmp.eq.s32.totalorder %s16, 0
      %p113 = por %p111, %p112
      %p114 = scmp.ne.s32.totalorder %s106, %s108
      %p115 = scmp.eq.s32.totalorder %s21, 3
      %p116 = por %p114, %p115
      %p117 = scmp.ne.s32.totalorder %s108, %s109
      %p118 = scmp.eq.s32.totalorder %s21, 0
      %p119 = por %p117, %p118
      %p120 = scmp.ne.s32.totalorder %s108, %s109
      %p121 = scmp.eq.s32.totalorder %s22, 3
      %p122 = por %p120, %p121
      %p124 = scmp.ne.s32.totalorder %s109, %s123
      %p125 = scmp.eq.s32.totalorder %s22, 0
      %p126 = por %p124, %p125
      %s128 = sadd.s32 %s127, 1
      %p131 = scmp.eq.s32.totalorder %s16, 3
      %p132 = scmp.ne.s32.totalorder %s127, %s129
      %p133 = scmp.eq.s32.totalorder %s16, 0
      %p134 = por %p132, %p133
      %p135 = scmp.ne.s32.totalorder %s127, %s129
      %p136 = scmp.eq.s32.totalorder %s21, 3
      %p137 = por %p135, %p136
      %p138 = scmp.ne.s32.totalorder %s129, %s130
      %p139 = scmp.eq.s32.totalorder %s21, 0
      %p140 = por %p138, %p139
      %p141 = scmp.ne.s32.totalorder %s129, %s130
      %p142 = scmp.eq.s32.totalorder %s22, 3
      %p143 = por %p141, %p142
      %p145 = scmp.ne.s32.totalorder %s130, %s144
      %p146 = scmp.eq.s32.totalorder %s22, 0
      %p147 = por %p145, %p146
      %s148 = ssub.s32 %s23, %s35
      %s149 = ssub.s32 %s24, %s31
      %s150 = sor.u32 %s148, %s149
      %p151 = scmp.eq.s32.totalorder %s150, 0
      %s153 = sadd.s32 %s152, 1
      %s154 = scalar_select %p151, %s152, %s153
      %p157 = pneg %p151
      %p158 = scmp.eq.s32.totalorder %s16, 3
      %p159 = por %p157, %p158
      %p160 = scmp.ne.s32.totalorder %s152, %s155
      %p161 = scmp.eq.s32.totalorder %s16, 0
      %p162 = por %p160, %p161
      %p163 = scmp.ne.s32.totalorder %s152, %s155
      %p164 = scmp.eq.s32.totalorder %s21, 3
      %p165 = por %p163, %p164
      %p166 = scmp.ne.s32.totalorder %s155, %s156
      %p167 = scmp.eq.s32.totalorder %s21, 0
      %p168 = por %p166, %p167
      %p169 = scmp.ne.s32.totalorder %s155, %s156
      %p170 = scmp.eq.s32.totalorder %s22, 3
      %p171 = por %p169, %p170
      %p173 = scmp.ne.s32.totalorder %s156, %s172
      %p174 = scmp.eq.s32.totalorder %s22, 0
      %p175 = por %p173, %p174
      %s176 = ssub.s32 %s23, %s35
      %p177 = scmp.eq.s32.totalorder %s176, 0
      %s179 = sadd.s32 %s178, 1
      %s180 = scalar_select %p177, %s178, %s179
      %p183 = pneg %p177
      %p184 = scmp.eq.s32.totalorder %s16, 3
      %p185 = por %p183, %p184
      %p186 = scmp.ne.s32.totalorder %s178, %s181
      %p187 = scmp.eq.s32.totalorder %s16, 0
      %p188 = por %p186, %p187
      %p189 = scmp.ne.s32.totalorder %s178, %s181
      %p190 = scmp.eq.s32.totalorder %s21, 3
      %p191 = por %p189, %p190
      %p192 = scmp.ne.s32.totalorder %s181, %s182
      %p193 = scmp.eq.s32.totalorder %s21, 0
      %p194 = por %p192, %p193
      %p195 = scmp.ne.s32.totalorder %s181, %s182
      %p196 = scmp.eq.s32.totalorder %s22, 3
      %p197 = por %p195, %p196
      %p199 = scmp.ne.s32.totalorder %s182, %s198
      %p200 = scmp.eq.s32.totalorder %s22, 0
      %p201 = por %p199, %p200
      %p202 = scmp.le.s32.totalorder 1, %s16
      %p203 = scmp.lt.s32.totalorder %s16, 5
      %p204 = pnand %p202, %p203
      %p205 = pneg %p204
      // Predicated region
      $region9: #{tpu_custom_call.1} parent=5 // pred_check
        _
      $region10: #{tpu_custom_call.1} parent=5 // pred_check_branch
        %207 = sbr.rel (%p204) target = $region12
      $region11: #{tpu_custom_call.1} parent=5 // pred_region
        %s208 = ssub.s32 %s16, 1
        // Predicated region
        $region13: #{tpu_custom_call.1} parent=11 // pred_check
          %p209 = pneg %p77
        $region14: #{tpu_custom_call.1} parent=11 // pred_check_branch
          %211 = sbr.rel (%p209) target = $region16
        $region15: #{tpu_custom_call.1} parent=11 // pred_region
          _
        $region16: #{tpu_custom_call.1} parent=11 // pred_fallthru
          _
        // Predicated region
        $region17: #{tpu_custom_call.1} parent=11 // pred_check
          %p212 = pneg %p98
        $region18: #{tpu_custom_call.1} parent=11 // pred_check_branch
          %214 = sbr.rel (%p212) target = $region20
        $region19: #{tpu_custom_call.1} parent=11 // pred_region
          _
        $region20: #{tpu_custom_call.1} parent=11 // pred_fallthru
          _
        // Predicated region
        $region21: #{tpu_custom_call.1} parent=11 // pred_check
          %p215 = pneg %p119
        $region22: #{tpu_custom_call.1} parent=11 // pred_check_branch
          %217 = sbr.rel (%p215) target = $region24
        $region23: #{tpu_custom_call.1} parent=11 // pred_region
          _
        $region24: #{tpu_custom_call.1} parent=11 // pred_fallthru
          _
        // Predicated region
        $region25: #{tpu_custom_call.1} parent=11 // pred_check
          %p218 = pneg %p140
        $region26: #{tpu_custom_call.1} parent=11 // pred_check_branch
          %220 = sbr.rel (%p218) target = $region28
        $region27: #{tpu_custom_call.1} parent=11 // pred_region
          _
        $region28: #{tpu_custom_call.1} parent=11 // pred_fallthru
          _
      $region12: #{tpu_custom_call.1} parent=5 // pred_fallthru
        _
      %p221 = scmp.lt.s32.totalorder %s16, 4
      // Predicated region
      $region29: #{tpu_custom_call.1} parent=5 // pred_check
        %p222 = pneg %p221
      $region30: #{tpu_custom_call.1} parent=5 // pred_check_branch
        %224 = sbr.rel (%p222) target = $region32
      $region31: #{tpu_custom_call.1} parent=5 // pred_region
        // Predicated region
        $region33: #{tpu_custom_call.1} parent=31 // pred_check
          %p225 = pneg %p50
        $region34: #{tpu_custom_call.1} parent=31 // pred_check_branch
          %227 = sbr.rel (%p225) target = $region36
        $region35: #{tpu_custom_call.1} parent=31 // pred_region
          %p228 = scmp.lt.s32.totalorder %s23, 1
          %s229 = scalar_select %p228, %s23, 1
          %p230 = scmp.lt.s32.totalorder %s24, 1
          %s231 = scalar_select %p230, %s24, 1
          %s232 = smul.addr %s229, 2
          %s233 = sadd.s32 %s231, %s232
          %s234 = smul.addr %s233, 4
          %s235 = scalar_lea.vmem %s0, %s234
        $region36: #{tpu_custom_call.1} parent=31 // pred_fallthru
          _
      $region32: #{tpu_custom_call.1} parent=5 // pred_fallthru
        _
      %p236 = scmp.le.s32.totalorder 1, %s16
      %p237 = scmp.lt.s32.totalorder %s16, 5
      %p238 = pnand %p236, %p237
      %p239 = pneg %p238
      // Predicated region
      $region37: #{tpu_custom_call.1} parent=5 // pred_check
        _
      $region38: #{tpu_custom_call.1} parent=5 // pred_check_branch
        %241 = sbr.rel (%p238) target = $region40
      $region39: #{tpu_custom_call.1} parent=5 // pred_region
        %s242 = ssub.s32 %s16, 1
        %p243 = scmp.lt.s32.totalorder %s25, 1
        %s244 = scalar_select %p243, %s25, 1
        %p245 = scmp.lt.s32.totalorder %s26, 1
        %s246 = scalar_select %p245, %s26, 1
        %s247 = smul.addr %s244, 2
        %s248 = sadd.s32 %s246, %s247
        %s249 = smul.addr %s248, 4
        %s250 = scalar_lea.vmem %s0, %s249
        %p251 = pneg %p56
        %p252 = pneg %p53
        %p253 = pneg %p77
        %p254 = pneg %p74
        %p255 = pneg %p98
        %p256 = pneg %p95
        %p257 = pneg %p119
        %p258 = pneg %p116
        %p259 = pneg %p140
        %p260 = pneg %p137
        %p261 = pneg %p168
        %p262 = pneg %p165
        %p263 = scmp.lt.s32.totalorder %s25, 1
        %s264 = scalar_select %p263, %s25, 1
        %p265 = scmp.lt.s32.totalorder %s26, 1
        %s266 = scalar_select %p265, %s26, 1
        %s267 = smul.addr %s264, 2
        %s268 = sadd.s32 %s266, %s267
        %s269 = smul.addr %s268, 8
        %s270 = scalar_lea.vmem %s5, %s269
        %p271 = pneg %p194
        %p272 = pneg %p191
        %s273 = sand.u32 %s181, 1
        %s274 = scalar_lea.sflag [#allocation3], %s273
        %s275 = sand.u32 %s181, 1
        %s276 = scalar_lea.vmem [#allocation2], %s275
        %p277 = scmp.lt.s32.totalorder %s25, 1
        %s278 = scalar_select %p277, %s25, 1
        %p279 = scmp.lt.s32.totalorder %s26, 1
        %s280 = scalar_select %p279, %s26, 1
        %s281 = smul.addr %s278, 2
        %s282 = sadd.s32 %s280, %s281
        %s283 = smul.addr %s282, 4
        %s284 = scalar_lea.vmem %s0, %s283
        %p285 = scmp.lt.s32.totalorder %s25, 1
        %s286 = scalar_select %p285, %s25, 1
        %p287 = scmp.lt.s32.totalorder %s26, 1
        %s288 = scalar_select %p287, %s26, 1
        %s289 = smul.addr %s286, 2
        %s290 = sadd.s32 %s288, %s289
        %s291 = smul.addr %s290, 8
        %s292 = scalar_lea.vmem %s5, %s291
        %v293 = vld [vmem:[%s284] sm:$0xf]
        %v294 = vunpack.c.l.bf16 %v293
        %296 = vrot.lane.b32.xlu0 %v294, 15
        %v297 = vpop.permute.xlu0 %296
        %v299 = vsub.f32 %v294, %v297
        %v300 = vrcp.pop %v299
        %v301 = vlaneseq
        %v302 = vand.u32 %v301, 127
        %vm303 = vcmp.lt.s32.totalorder %v302, 16
        %304 = vset.pattern.permute.xlu0 0
        %305 = vperm.xlu0 %304, %v294
        %v306 = vpop.permute.xlu0 %305
        %v308 = vsub.f32 %v294, %v306
        %310 = vset.pattern.permute.xlu0 15
        %311 = vperm.xlu0 %310, %v300
        %v312 = vpop.permute.xlu0 %311
        %v314 = vmul.f32 %v308, %v312
        %v315 = vsel %vm303, %v314, %v294
        %v316 = vld [vmem:[%s1] sm:$0xff]
        %v317 = vld [vmem:[%s1 + $0x8] sm:$0xff]
        %v318 = vld [vmem:[%s1 + $0x10] sm:$0xff]
        %v319 = vld [vmem:[%s1 + $0x18] sm:$0xff]
        %v320 = vld [vmem:[%s1 + $0x20] sm:$0xff]
        %v321 = vld [vmem:[%s1 + $0x28] sm:$0xff]
        %v322 = vld [vmem:[%s1 + $0x30] sm:$0xff]
        %v323 = vld [vmem:[%s1 + $0x38] sm:$0xff]
        %v324 = vld [vmem:[%s2] sm:$0x1]
        %v326 = vlaneseq
        %v327 = vshrl.u32 %v326, 7
        %v328 = vsub.s32 0, %v327
        %v329 = vrot.slane %v324, %v328
        %vm331 = vcmask 523264
        %v333 = vsel %vm331, %v315, 0
        %335 = vmatprep.subr.mxu0 0.0
        %336 = vmatpush1.msra.mxu0 %v316
        %337 = vmatprep.subr.mxu0 0.0
        %338 = vmatpush1.msra.mxu0 %v317
        %339 = vmatprep.subr.mxu0 0.0
        %340 = vmatpush1.msra.mxu0 %v318
        %341 = vmatprep.subr.mxu0 0.0
        %342 = vmatpush1.msra.mxu0 %v319
        %343 = vmatprep.subr.mxu0 0.0
        %344 = vmatpush1.msra.mxu0 %v320
        %345 = vmatprep.subr.mxu0 0.0
        %346 = vmatpush1.msra.mxu0 %v321
        %347 = vmatprep.subr.mxu0 0.0
        %348 = vmatpush1.msra.mxu0 %v322
        %349 = vmatprep.subr.mxu0 0.0
        %350 = vmatpush1.msra.mxu0 %v323
        %351 = vmatprep.subr.mxu0 0.0
        %352 = vmatpush1.msra.mxu0 0.0
        %353 = vmatprep.subr.mxu0 0.0
        %354 = vmatpush1.msra.mxu0 0.0
        %355 = vmatprep.subr.mxu0 0.0
        %356 = vmatpush1.msra.mxu0 0.0
        %357 = vmatprep.subr.mxu0 0.0
        %358 = vmatpush1.msra.mxu0 0.0
        %359 = vmatprep.subr.mxu0 0.0
        %360 = vmatpush1.msra.mxu0 0.0
        %361 = vmatprep.subr.mxu0 0.0
        %362 = vmatpush1.msra.mxu0 0.0
        %363 = vmatprep.subr.mxu0 0.0
        %364 = vmatpush1.msra.mxu0 0.0
        %365 = vmatprep.subr.mxu0 0.0
        %366 = vmatpush1.msra.mxu0 0.0
        %367 = vmatprep.subr.mxu0 0.0
        %368 = vmatpush1.msra.mxu0 0.0
        %369 = vmatprep.subr.mxu0 0.0
        %370 = vmatpush1.msra.mxu0 0.0
        %371 = vmatprep.subr.mxu0 0.0
        %372 = vmatpush1.msra.mxu0 0.0
        %373 = vmatprep.subr.mxu0 0.0
        %374 = vmatpush1.msra.mxu0 0.0
        %375 = vmatprep.subr.mxu0 0.0
        %376 = vmatpush1.msra.mxu0 0.0
        %377 = vmatprep.subr.mxu0 0.0
        %378 = vmatpush1.msra.mxu0 0.0
        %379 = vmatprep.subr.mxu0 0.0
        %380 = vmatpush1.msra.mxu0 0.0
        %381 = vmatprep.subr.mxu0 0.0
        %382 = vmatpush1.msra.mxu0 0.0
        %383 = vmatprep.subr.mxu0 0.0
        %384 = vmatpush1.msra.mxu0 0.0
        %385 = vmatprep.subr.mxu0 0.0
        %386 = vmatpush1.msra.mxu0 0.0
        %387 = vmatprep.subr.mxu0 0.0
        %388 = vmatpush1.msra.mxu0 0.0
        %389 = vmatprep.subr.mxu0 0.0
        %390 = vmatpush1.msra.mxu0 0.0
        %391 = vmatprep.subr.mxu0 0.0
        %392 = vmatpush1.msra.mxu0 0.0
        %393 = vmatprep.subr.mxu0 0.0
        %394 = vmatpush1.msra.mxu0 0.0
        %395 = vmatprep.subr.mxu0 0.0
        %396 = vmatpush1.msra.mxu0 0.0
        %397 = vmatprep.subr.mxu0 0.0
        %398 = vmatpush1.msra.mxu0 0.0
        %399 = vmatprep.mubr.f32.mxu0 0.0
        %400 = vmatmul.mubr.f32.gmra.mrb[0].mxu0 %v333
        %v401 = vpop.f32.mrb[0].mxu0
        %v402 = vadd.f32 %v329, %v401
        %v403 = vpop.f32.mrb[0].mxu0
        %404 = vdwg.mxu0
        %v405 = vmax.f32 %v402, 0.0
        %v406 = vld [vmem:[%s3] sm:$0xff]
        %v407 = vld [vmem:[%s3 + $0x8] sm:$0xff]
        %v408 = vld [vmem:[%s3 + $0x10] sm:$0xff]
        %v409 = vld [vmem:[%s3 + $0x18] sm:$0xff]
        %v410 = vld [vmem:[%s4] sm:$0x1]
        %v412 = vlaneseq
        %v413 = vshrl.u32 %v412, 7
        %v414 = vsub.s32 0, %v413
        %v415 = vrot.slane %v410, %v414
        %vm417 = vcmask 261120
        %v419 = vsel %vm417, %v405, 0
        %421 = vmatprep.subr.mxu0 0.0
        %422 = vmatpush1.msra.mxu0 %v406
        %423 = vmatprep.subr.mxu0 0.0
        %424 = vmatpush1.msra.mxu0 %v407
        %425 = vmatprep.subr.mxu0 0.0
        %426 = vmatpush1.msra.mxu0 %v408
        %427 = vmatprep.subr.mxu0 0.0
        %428 = vmatpush1.msra.mxu0 %v409
        %429 = vmatprep.subr.mxu0 0.0
        %430 = vmatpush1.msra.mxu0 0.0
        %431 = vmatprep.subr.mxu0 0.0
        %432 = vmatpush1.msra.mxu0 0.0
        %433 = vmatprep.subr.mxu0 0.0
        %434 = vmatpush1.msra.mxu0 0.0
        %435 = vmatprep.subr.mxu0 0.0
        %436 = vmatpush1.msra.mxu0 0.0
        %437 = vmatprep.subr.mxu0 0.0
        %438 = vmatpush1.msra.mxu0 0.0
        %439 = vmatprep.subr.mxu0 0.0
        %440 = vmatpush1.msra.mxu0 0.0
        %441 = vmatprep.subr.mxu0 0.0
        %442 = vmatpush1.msra.mxu0 0.0
        %443 = vmatprep.subr.mxu0 0.0
        %444 = vmatpush1.msra.mxu0 0.0
        %445 = vmatprep.subr.mxu0 0.0
        %446 = vmatpush1.msra.mxu0 0.0
        %447 = vmatprep.subr.mxu0 0.0
        %448 = vmatpush1.msra.mxu0 0.0
        %449 = vmatprep.subr.mxu0 0.0
        %450 = vmatpush1.msra.mxu0 0.0
        %451 = vmatprep.subr.mxu0 0.0
        %452 = vmatpush1.msra.mxu0 0.0
        %453 = vmatprep.subr.mxu0 0.0
        %454 = vmatpush1.msra.mxu0 0.0
        %455 = vmatprep.subr.mxu0 0.0
        %456 = vmatpush1.msra.mxu0 0.0
        %457 = vmatprep.subr.mxu0 0.0
        %458 = vmatpush1.msra.mxu0 0.0
        %459 = vmatprep.subr.mxu0 0.0
        %460 = vmatpush1.msra.mxu0 0.0
        %461 = vmatprep.subr.mxu0 0.0
        %462 = vmatpush1.msra.mxu0 0.0
        %463 = vmatprep.subr.mxu0 0.0
        %464 = vmatpush1.msra.mxu0 0.0
        %465 = vmatprep.subr.mxu0 0.0
        %466 = vmatpush1.msra.mxu0 0.0
        %467 = vmatprep.subr.mxu0 0.0
        %468 = vmatpush1.msra.mxu0 0.0
        %469 = vmatprep.subr.mxu0 0.0
        %470 = vmatpush1.msra.mxu0 0.0
        %471 = vmatprep.subr.mxu0 0.0
        %472 = vmatpush1.msra.mxu0 0.0
        %473 = vmatprep.subr.mxu0 0.0
        %474 = vmatpush1.msra.mxu0 0.0
        %475 = vmatprep.subr.mxu0 0.0
        %476 = vmatpush1.msra.mxu0 0.0
        %477 = vmatprep.subr.mxu0 0.0
        %478 = vmatpush1.msra.mxu0 0.0
        %479 = vmatprep.subr.mxu0 0.0
        %480 = vmatpush1.msra.mxu0 0.0
        %481 = vmatprep.subr.mxu0 0.0
        %482 = vmatpush1.msra.mxu0 0.0
        %483 = vmatprep.subr.mxu0 0.0
        %484 = vmatpush1.msra.mxu0 0.0
        %485 = vmatprep.mubr.f32.mxu0 0.0
        %486 = vmatmul.mubr.f32.gmra.mrb[0].mxu0 %v419
        %v487 = vpop.f32.mrb[0].mxu0
        %v488 = vadd.f32 %v415, %v487
        %v489 = vpop.f32.mrb[0].mxu0
        %490 = vdwg.mxu0
        %491 = vmax.xlane.f32.xlu0 %v488
        %v492 = vpop.xlane.xlu0 %491
        %vm493 = vcmp.eq.f32.partialorder %v488, %v492
        %v494 = vsel %vm493, %v302, 128
        %v495 = vand.u32 %v494, 65535
        %v496 = vshra.s32 %v494, 16
        %v497 = vcvt.s32.f32 %v495
        %v498 = vcvt.s32.f32 %v496
        %499 = vmin.xlane.f32.xlu0 %v498
        %v500 = vpop.xlane.xlu0 %499
        %vm501 = vcmp.eq.f32.partialorder %v498, %v500
        %v502 = vsel %vm501, %v497, inf
        %503 = vmin.xlane.f32.xlu0 %v502
        %v504 = vpop.xlane.xlu0 %503
        %v505 = vcvt.f32.s32 %v504
        %v506 = vcvt.f32.s32 %v500
        %v507 = vshll.u32 %v506, 16
        %v508 = vadd.s32 %v507, %v505
        %vm509 = vcmask 7168
        %510 = vst.msk [vmem:[%s292] sm:$0xff] %vm509, %v508
        %vm511 = vcmp.eq.s32.totalorder %v302, %v508
        %v512 = vsel %vm511, 1, 0
        %v513 = vcvt.s32.f32 %v512
        %p514 = scmp.eq.s32.totalorder %s26, 0
        // Predicated region
        $region41: #{tpu_custom_call.1} parent=39 // pred_check
          %p515 = pneg %p514
        $region42: #{tpu_custom_call.1} parent=39 // pred_check_branch
          %517 = sbr.rel (%p515) target = $region44
        $region43: #{tpu_custom_call.1} parent=39 // pred_region
          %518 = vst [vmem:[%s276] sm:$0x1] 0.0
        $region44: #{tpu_custom_call.1} parent=39 // pred_fallthru
          _
        %v519 = vld [vmem:[%s276] sm:$0x1]
        %v520 = vrot.slane %v513, 4
        %v521 = vadd.f32 %v513, %v520
        %v522 = vrot.slane %v521, 2
        %v523 = vadd.f32 %v521, %v522
        %v524 = vrot.slane %v523, 1
        %v525 = vadd.f32 %v523, %v524
        %v526 = vadd.f32 %v519, %v525
        %527 = vst [vmem:[%s276] sm:$0x1] %v526
        %p528 = scmp.lt.s32.totalorder %s25, 1
        %s529 = scalar_select %p528, %s25, 1
        %p530 = scmp.lt.s32.totalorder %s26, 1
        %s531 = scalar_select %p530, %s26, 1
        %s532 = smul.addr %s529, 2
        %s533 = sadd.s32 %s531, %s532
        %s534 = smul.addr %s533, 8
        %s535 = scalar_lea.vmem %s5, %s534
        %s536 = sand.u32 %s181, 1
        %s537 = scalar_lea.sflag [#allocation3], %s536
        %s538 = sand.u32 %s181, 1
        %s539 = scalar_lea.vmem [#allocation2], %s538
        // Predicated region
        $region45: #{tpu_custom_call.1} parent=39 // pred_check
          %p540 = pneg %p165
        $region46: #{tpu_custom_call.1} parent=39 // pred_check_branch
          %542 = sbr.rel (%p540) target = $region48
        $region47: #{tpu_custom_call.1} parent=39 // pred_region
          _
        $region48: #{tpu_custom_call.1} parent=39 // pred_fallthru
          _
        // Predicated region
        $region49: #{tpu_custom_call.1} parent=39 // pred_check
          %p543 = pneg %p191
        $region50: #{tpu_custom_call.1} parent=39 // pred_check_branch
          %545 = sbr.rel (%p543) target = $region52
        $region51: #{tpu_custom_call.1} parent=39 // pred_region
          %s547 = ssub.s32 16, 16
          %548 = vsyncadd %s537, %s547
          %s549 = smul.addr %s25, 16
          %s550 = scalar_lea.hbm %s6, %s549
          %s552 = sshll.u32 %s539, 4
          %s553 = int_to_ptr.vmem [resolvable:$true] %s552
          %555 = dma.vmem_to_hbm [thread:$0]  %s553, 16, %s550, %s537
        $region52: #{tpu_custom_call.1} parent=39 // pred_fallthru
          _
      $region40: #{tpu_custom_call.1} parent=5 // pred_fallthru
        _
      %p556 = scmp.le.s32.totalorder 2, %s16
      // Predicated region
      $region53: #{tpu_custom_call.1} parent=5 // pred_check
        %p557 = pneg %p556
      $region54: #{tpu_custom_call.1} parent=5 // pred_check_branch
        %559 = sbr.rel (%p557) target = $region56
      $region55: #{tpu_custom_call.1} parent=5 // pred_region
        %s560 = ssub.s32 %s16, 2
        // Predicated region
        $region57: #{tpu_custom_call.1} parent=55 // pred_check
          %p561 = pneg %p171
        $region58: #{tpu_custom_call.1} parent=55 // pred_check_branch
          %563 = sbr.rel (%p561) target = $region60
        $region59: #{tpu_custom_call.1} parent=55 // pred_region
          %p564 = scmp.lt.s32.totalorder %s27, 1
          %s565 = scalar_select %p564, %s27, 1
          %p566 = scmp.lt.s32.totalorder %s28, 1
          %s567 = scalar_select %p566, %s28, 1
          %s568 = smul.addr %s565, 2
          %s569 = sadd.s32 %s567, %s568
          %s570 = smul.addr %s569, 8
          %s571 = scalar_lea.vmem %s5, %s570
        $region60: #{tpu_custom_call.1} parent=55 // pred_fallthru
          _
        // Predicated region
        $region61: #{tpu_custom_call.1} parent=55 // pred_check
          %p572 = pneg %p197
        $region62: #{tpu_custom_call.1} parent=55 // pred_check_branch
          %574 = sbr.rel (%p572) target = $region64
        $region63: #{tpu_custom_call.1} parent=55 // pred_region
          %s575 = sand.u32 %s182, 1
          %s576 = scalar_lea.sflag [#allocation3], %s575
          %s577 = sand.u32 %s182, 1
          %s578 = scalar_lea.vmem [#allocation2], %s577
          %579 = dma.done %s576, 16
        $region64: #{tpu_custom_call.1} parent=55 // pred_fallthru
          _
      $region56: #{tpu_custom_call.1} parent=5 // pred_fallthru
        _
    $region6: #{tpu_custom_call.1} parent=1 // loop_footer
      %s20 = sadd.s32 1, %s16
    $region7: #{tpu_custom_call.1} parent=1 // loop_footer_branch
      %15 = sbr.rel target = $region3
    $region8: #{tpu_custom_call.1} parent=1 // loop_exit
      _
    %580 = vsyncpa [#allocation3], 1
    %s581 = scalar_lea.sflag [#allocation3], 1
    %582 = vsyncpa %s581, 1

</llo_original>
